<compile_context>
chip_gen: v6e
topology: v6e:2x2x1
jax: 0.10.0
libtpu: 0.0.40
codegen_flags: <defaults>
</compile_context>

<pallas_src>
import jax
import jax.numpy as jnp
from jax.experimental import pallas as pl
from jax.experimental.pallas import tpu as pltpu

_MIN_BYTES_PER_CHUNK = 4 * 1024 * 1024  # only split DMAs for large copies
_MAX_DMA_CHUNKS = 4


def _choose_chunks(lead: int, nbytes: int) -> int:
    """Number of parallel DMA chunks (split along the leading axis)."""
    if lead < 2 or nbytes < 2 * _MIN_BYTES_PER_CHUNK:
        return 1
    for c in (4, 3, 2):
        if c <= _MAX_DMA_CHUNKS and lead % c == 0 and nbytes // c >= _MIN_BYTES_PER_CHUNK:
            return c
    return 1


def _make_identity_dma_kernel(n_chunks: int, lead: int):
    """Kernel: copy x_ref -> o_ref with n_chunks in-flight HBM->HBM DMAs."""
    chunk = lead // n_chunks if n_chunks > 1 else lead

    def kernel(x_ref, o_ref, sem):
        if n_chunks == 1:
            cp = pltpu.make_async_copy(x_ref, o_ref, sem.at[0])
            cp.start()
            cp.wait()
        else:
            copies = []
            for c in range(n_chunks):  # static unroll; issues overlap
                lo = c * chunk
                cp = pltpu.make_async_copy(
                    x_ref.at[pl.ds(lo, chunk)],
                    o_ref.at[pl.ds(lo, chunk)],
                    sem.at[c],
                )
                cp.start()
                copies.append(cp)
            for cp in copies:
                cp.wait()

    return kernel


def embedding_forward(x: jax.Array, *, use_kernel: bool = True) -> jax.Array:
    """Identity forward pass of the Embedding module.

    `use_kernel=False` is the fastest path (no HBM traffic at all). The
    default keeps a Pallas kernel for API parity: one HBM->HBM DMA copy.
    """
    if not use_kernel or x.size == 0:
        return x

    orig_shape = x.shape
    xw = x.reshape(1) if x.ndim == 0 else x  # metadata-only reshape for 0-d
    lead = xw.shape[0]
    nbytes = xw.size * jnp.dtype(xw.dtype).itemsize
    n_chunks = _choose_chunks(lead, nbytes)

    out = pl.pallas_call(
        _make_identity_dma_kernel(n_chunks, lead),
        out_shape=jax.ShapeDtypeStruct(xw.shape, xw.dtype),
        in_specs=[pl.BlockSpec(memory_space=pl.ANY)],
        out_specs=pl.BlockSpec(memory_space=pl.ANY),
        scratch_shapes=[pltpu.SemaphoreType.DMA((n_chunks,))],
        cost_estimate=pl.CostEstimate(
            flops=0, transcendentals=0, bytes_accessed=2 * nbytes
        ),
    )(xw)

    return out.reshape(orig_shape)


if __name__ == "__main__":
    key = jax.random.PRNGKey(0)

    # Input consistent with the module's generic tensor pass-through.
    x = jax.random.normal(key, (2, 4, 16, 16), dtype=jnp.float32)
    y = jax.block_until_ready(embedding_forward(x))
    assert y.shape == x.shape and y.dtype == x.dtype
    assert bool(jnp.array_equal(y, x))

    # Odd / non-128-multiple shape: DMA copy has no lane-layout constraints.
    x2 = jax.random.normal(jax.random.PRNGKey(1), (3, 5, 7), dtype=jnp.bfloat16)
    y2 = jax.block_until_ready(embedding_forward(x2))
    assert y2.shape == x2.shape and y2.dtype == x2.dtype
    assert bool(jnp.array_equal(y2, x2))

    print("KERNEL_OK")
</pallas_src>

<mosaic_0001>
module attributes {stable_mosaic.version = 11 : i64} {
  func.func @kernel(%arg0: memref<2x4x16x16xf32, #tpu.memory_space<any>>, %arg1: memref<2x4x16x16xf32, #tpu.memory_space<any>>, %arg2: memref<1x!tpu.dma_semaphore, #tpu.memory_space<semaphore_mem>>) attributes {dimension_semantics = [], scalar_prefetch = 0 : i64, scratch_operands = 1 : i64, tpu.core_type = #tpu.core_type<tc>} {
    %c0_i32 = arith.constant 0 : i32
    %0 = tpu.memref_slice %arg2[%c0_i32] : memref<1x!tpu.dma_semaphore, #tpu.memory_space<semaphore_mem>> -> memref<1x!tpu.dma_semaphore, #tpu.memory_space<semaphore_mem>>
    %1 = tpu.memref_squeeze %0 : memref<1x!tpu.dma_semaphore, #tpu.memory_space<semaphore_mem>> -> memref<!tpu.dma_semaphore, #tpu.memory_space<semaphore_mem>>
    tpu.enqueue_dma source(%arg0 : memref<2x4x16x16xf32, #tpu.memory_space<any>>) target(%arg1 : memref<2x4x16x16xf32, #tpu.memory_space<any>>) target_semaphore(%1 : memref<!tpu.dma_semaphore, #tpu.memory_space<semaphore_mem>>)
    %c0_i32_0 = arith.constant 0 : i32
    %2 = tpu.memref_slice %arg2[%c0_i32_0] : memref<1x!tpu.dma_semaphore, #tpu.memory_space<semaphore_mem>> -> memref<1x!tpu.dma_semaphore, #tpu.memory_space<semaphore_mem>>
    %3 = tpu.memref_squeeze %2 : memref<1x!tpu.dma_semaphore, #tpu.memory_space<semaphore_mem>> -> memref<!tpu.dma_semaphore, #tpu.memory_space<semaphore_mem>>
    tpu.wait_dma2 semaphore(%3 : memref<!tpu.dma_semaphore, #tpu.memory_space<semaphore_mem>>) src(%arg0 : memref<2x4x16x16xf32, #tpu.memory_space<any>>) dst(%arg1 : memref<2x4x16x16xf32, #tpu.memory_space<any>>)
    return
  }
}

</mosaic_0001>

<llo_original>
// kernel: tpu_custom_call.1
$region0: #{tpu_custom_call.1}
  #allocation0 [shape = 'u32[]', space=smem, size = 0x4, offset = 0x4, fixed_abs, tag = 'smem constant byte address 0x4 - core index']
  #allocation1 [shape = 'u32[144,128]{1,0:T(1,128)}', space=vmem, size = 0x12000, scoped, tag = 'internal scratch']
  #allocation2 [shape = 's32[1]{0}', space=sflag, size = 0x4, scoped, tag = 'scratch operand']
  #allocation3 [shape = 's32[]', space=sflag, size = 0x4, offset = 0, fixed_abs, tag = 'sflag constant byte address 0x0 - dummy sync flag']
  #allocation4 [shape = 'u32[0]{0}', space=smem, size = 0, offset = 0, fixed_abs, tag = 'smem constant byte address 0x0 - null']
  %s0 = inlined_call_operand.hbm [shape: f32[2,4,16,16], index: 0, kind: input, shape index: {}]
  %s1 = inlined_call_operand.hbm [shape: f32[2,4,16,16], index: 1, kind: output, shape index: {}]
  %s2 = sld [smem:[#allocation0]]
  $region2: #{tpu_custom_call.1} parent=0
    _
  %s4 = ssub.s32 1, %s2
  %s5 = scalar_select 0, %s4, %s2
  %s7 = sshll.u32 1, 14
  %s8 = sxor.u32 4294967295, %s7
  %12 = dma.general %s0, 2048, %s1, [#allocation2], 131072, [#allocation4], 0, 0
  %s13 = smul.u32 2, 4
  %s14 = smul.u32 %s13, 16
  %s15 = smul.u32 %s14, 1
  %s16 = sshll.u32 %s15, 4
  %17 = dma.done [#allocation2], %s16
  %18 = vsyncmov [#allocation2]
  %s19 = vpop.sfrf %18
  %p20 = scmp.eq.s32.totalorder %s19, 0
  %p21 = pneg %p20
  %23 = shalt.err (%p21)

</llo_original>
